<compile_context>
chip_gen: v5e
topology: v5e:2x2
jax: 0.10.0
libtpu: 0.0.40
codegen_flags: <defaults>
</compile_context>

<pallas_src>
import numpy as np
import jax
import jax.numpy as jnp
from jax.experimental import pallas as pl
from jax.experimental.pallas import tpu as pltpu

H = W = 16
HW = H * W                      # 256 -> lane axis (2 x 128)
CIN = 4                         # real input channels
CINP = 8                        # input channels padded to a full sublane group
COUT = 8
POOL_HW = (H // 2) * (W // 2)   # 64
FC_IN = COUT * POOL_HW          # 512 (C-major flatten, same as x.view(N, -1))
FC_OUT = 10
FC_OUT_PAD = 128                # pad fc output lanes to a full vreg width
MAX_IMAGES_PER_STEP = 8         # images fused per grid step


# ---------------------------------------------------------------------------
# pltpu.roll lane-rotation sign convention, probed once on device so each
# im2col tap needs exactly one roll (no convention-agnostic double roll).
# ---------------------------------------------------------------------------
_ROLL_SHIFT_SIGN = None


def _roll_probe_kernel(x_ref, o_ref):
    o_ref[...] = pltpu.roll(x_ref[...], 1, axis=1)


def _detect_roll_sign():
    global _ROLL_SHIFT_SIGN
    if _ROLL_SHIFT_SIGN is None:
        x = jnp.tile(jnp.arange(128, dtype=jnp.float32)[None, :], (8, 1))
        y = pl.pallas_call(
            _roll_probe_kernel,
            out_shape=jax.ShapeDtypeStruct((8, 128), jnp.float32))(x)
        # jnp.roll convention (y[p] = x[p-1]): y[0] == 127 -> use shift = -s
        # opposite convention (y[p] = x[p+1]): y[0] == 1   -> use shift = +s
        _ROLL_SHIFT_SIGN = -1 if int(y[0, 0]) == 127 else 1
    return _ROLL_SHIFT_SIGN


def _build_tap_masks():
    """Trace-time boundary masks: masks[t, 0, p] = 1 iff pixel p has a valid
    in-image neighbour at offset (kh-1, kw-1) for tap t = kh*3 + kw."""
    p = np.arange(HW)
    hh, ww = p // W, p % W
    m = np.zeros((9, 1, HW), np.float32)
    for kh in range(3):
        for kw in range(3):
            dh, dw = kh - 1, kw - 1
            m[kh * 3 + kw, 0] = ((hh + dh >= 0) & (hh + dh < H) &
                                 (ww + dw >= 0) & (ww + dw < W))
    return jnp.asarray(m)


# ---------------------------------------------------------------------------
# Fused kernel: B images per grid step, everything resident in VMEM.
# ---------------------------------------------------------------------------
def _fused_kernel(x_ref, w2d_ref, cb_ref, masks_ref, pmat_ref, wfc_ref, fcb_ref,
                  conv_ref, relu_ref, pool_ref, fc_ref):
    # x_ref:    (B*CINP, HW)               B images, rows = (image, channel)
    # w2d_ref:  (COUT, 9*CINP)             im2col conv weights (zero pad cols)
    # cb_ref:   (COUT, 1)                  conv bias
    # masks_ref:(9, 1, HW)                 static per-tap boundary masks
    # pmat_ref: (HW, POOL_HW)              2x2 avg-pool selector (0.25 entries)
    # wfc_ref:  (COUT, POOL_HW, 128)       fc weight, out-features padded to 128
    # fcb_ref:  (1, 128)                   fc bias (padded)
    rows = x_ref.shape[0]
    B = rows // CINP
    x = x_ref[...]                                   # (B*CINP, HW) f32
    w2d = w2d_ref[...]                               # (COUT, 72)
    cb = cb_ref[...]                                 # (COUT, 1)

    # --- im2col: one lane roll + one static-mask multiply per tap -----------
    taps = []
    for kh in range(3):
        for kw in range(3):
            t = kh * 3 + kw
            s = (kh - 1) * W + (kw - 1)              # tap[p] = x[p + s] (masked)
            if s == 0:
                taps.append(x)                       # center tap: no roll/mask
            else:
                rolled = pltpu.roll(x, (_ROLL_SHIFT_SIGN * s) % HW, axis=1)
                taps.append(rolled * masks_ref[t])   # masks_ref[t]: (1, HW)

    # --- conv3x3 (padding=1) + bias: one (COUT,72)x(72,256) matmul / image ---
    # Tap slabs are 8-row (full sublane group) slices -> aligned, free concat.
    conv_rows = []
    for b in range(B):
        patch = jnp.concatenate(
            [tap[b * CINP:(b + 1) * CINP, :] for tap in taps], axis=0)
        conv_rows.append(jnp.dot(w2d, patch,
                                 preferred_element_type=jnp.float32) + cb)
    conv2 = jnp.concatenate(conv_rows, axis=0)       # (B*COUT, HW)
    relu2 = jnp.maximum(conv2, 0.0)

    # --- 2x2 / stride-2 average pool: one matmul vs. the constant selector ---
    pool2 = jnp.dot(relu2, pmat_ref[...],
                    preferred_element_type=jnp.float32)   # (B*COUT, POOL_HW)

    conv_ref[...] = conv2
    relu_ref[...] = relu2
    pool_ref[...] = pool2   # 64-lane store (masked vst); tiny, left as-is

    # --- fc on the (C-major flattened) pooled activation, batched over B -----
    # out = bias + sum_c pool[:, c, :] @ Wfc[c]   -> COUT matmuls with M = B.
    pool3 = pool2.reshape(B, COUT, POOL_HW)
    acc = jnp.zeros((B, FC_OUT_PAD), jnp.float32)
    for c in range(COUT):
        acc = acc + jnp.dot(pool3[:, c, :], wfc_ref[c],
                            preferred_element_type=jnp.float32)
    fc = acc + fcb_ref[...]                               # (B, FC_OUT_PAD)
    for b in range(B):
        fc_ref[b] = fc[b:b + 1, :]


# ---------------------------------------------------------------------------
# One-time weight re-layouts (setup only; no per-forward XLA glue).
# ---------------------------------------------------------------------------
def build_params(conv_w_oihw, conv_b, fc_w_oi, fc_b):
    # conv weights -> (COUT, 9*CINP); column = (kh*3 + kw)*CINP + ci, with zero
    # columns for the padded channels ci in [CIN, CINP).
    w = jnp.transpose(conv_w_oihw, (0, 2, 3, 1))               # (COUT,3,3,CIN)
    w = jnp.pad(w, ((0, 0), (0, 0), (0, 0), (0, CINP - CIN)))  # (COUT,3,3,CINP)
    w2d = w.reshape(COUT, 9 * CINP).astype(jnp.float32)
    cb2d = conv_b.reshape(COUT, 1).astype(jnp.float32)

    masks = _build_tap_masks()                                 # (9, 1, HW)

    # 2x2 average pool as (HW, POOL_HW) matrix: P[p, q] = 0.25 iff p in window q
    hh = np.arange(H)[:, None] // 2
    ww = np.arange(W)[None, :] // 2
    q_of_p = (hh * (W // 2) + ww).reshape(HW)
    pmat = (q_of_p[:, None] == np.arange(POOL_HW)[None, :]).astype(np.float32)
    pmat = jnp.asarray(pmat * 0.25)

    # fc: (FC_OUT, FC_IN) -> (FC_IN, 128-padded) -> (COUT, POOL_HW, 128); row
    # (c, q) matches the pooled activation's PyTorch C-major flatten order.
    wfc = jnp.zeros((FC_IN, FC_OUT_PAD), jnp.float32).at[:, :FC_OUT].set(fc_w_oi.T)
    wfc3 = wfc.reshape(COUT, POOL_HW, FC_OUT_PAD)
    fcb = jnp.zeros((1, FC_OUT_PAD), jnp.float32).at[0, :FC_OUT].set(fc_b)
    return (w2d, cb2d, masks, pmat, wfc3, fcb)


def _pick_batch(n):
    """Images per grid step: amortize per-step overhead, but keep >= 2 grid
    steps (when n >= 2) so v7x's two TensorCores can split the batch."""
    if n <= 1:
        return 1
    return min(MAX_IMAGES_PER_STEP, pl.cdiv(n, 2))


def fused_forward(x_nchw, params):
    _detect_roll_sign()            # eager probe (cached) before the kernel trace
    return _fused_forward_jit(x_nchw, params)


@jax.jit
def _fused_forward_jit(x_nchw, params):
    w2d, cb2d, masks, pmat, wfc3, fcb = params
    n = x_nchw.shape[0]
    B = _pick_batch(n)
    steps = pl.cdiv(n, B)
    n_pad = steps * B

    # Pad batch to a multiple of B and channels to CINP=8 (keeps every tap slab
    # a full sublane group -> free im2col concat).  Tiny, one-time XLA pad.
    x3 = x_nchw.reshape(n, CIN, HW)
    x3 = jnp.pad(x3, ((0, n_pad - n), (0, CINP - CIN), (0, 0)))
    x2 = x3.reshape(n_pad * CINP, HW)

    conv_f, relu_f, pool_f, fc_f = pl.pallas_call(
        _fused_kernel,
        out_shape=(
            jax.ShapeDtypeStruct((n_pad * COUT, HW), jnp.float32),
            jax.ShapeDtypeStruct((n_pad * COUT, HW), jnp.float32),
            jax.ShapeDtypeStruct((n_pad * COUT, POOL_HW), jnp.float32),
            jax.ShapeDtypeStruct((n_pad, 1, FC_OUT_PAD), jnp.float32),
        ),
        grid=(steps,),
        in_specs=[
            pl.BlockSpec((B * CINP, HW), lambda i: (i, 0)),
            pl.BlockSpec((COUT, 9 * CINP), lambda i: (0, 0)),
            pl.BlockSpec((COUT, 1), lambda i: (0, 0)),
            pl.BlockSpec((9, 1, HW), lambda i: (0, 0, 0)),
            pl.BlockSpec((HW, POOL_HW), lambda i: (0, 0)),
            pl.BlockSpec((COUT, POOL_HW, FC_OUT_PAD), lambda i: (0, 0, 0)),
            pl.BlockSpec((1, FC_OUT_PAD), lambda i: (0, 0)),
        ],
        out_specs=(
            pl.BlockSpec((B * COUT, HW), lambda i: (i, 0)),
            pl.BlockSpec((B * COUT, HW), lambda i: (i, 0)),
            pl.BlockSpec((B * COUT, POOL_HW), lambda i: (i, 0)),
            pl.BlockSpec((B, 1, FC_OUT_PAD), lambda i: (i, 0, 0)),
        ),
        compiler_params=pltpu.CompilerParams(
            dimension_semantics=("parallel",)),
    )(x2, w2d, cb2d, masks, pmat, wfc3, fcb)

    return {
        'conv1': conv_f.reshape(n_pad, COUT, H, W)[:n],
        'relu1': relu_f.reshape(n_pad, COUT, H, W)[:n],
        'pool1': pool_f.reshape(n_pad, COUT, H // 2, W // 2)[:n],
        'fc1': fc_f[:n, 0, :FC_OUT],
    }


_LAYER_NAMES = ('conv1', 'relu1', 'pool1', 'fc1')


class FeatureExtractor:
    """JAX mirror of the PyTorch FeatureExtractor forward (fully fused).

    All four layers run in a single Pallas kernel; the loop below only
    reproduces the name-filtering logic.  The pre-'fc' flatten (x.view(N, -1))
    is a no-op because the pooled activation is produced in C-major order.
    (PyTorch forward prints each layer name; suppressed to keep stdout clean.)
    """

    def __init__(self, params, extracted_layers):
        self.params = params
        self.extracted_layers = extracted_layers

    def __call__(self, x):
        acts = fused_forward(x, self.params)
        outputs = {}
        for name in _LAYER_NAMES:
            if self.extracted_layers is None or (
                    name in self.extracted_layers and 'fc' not in name):
                outputs[name] = acts[name]
        return outputs


def reference_forward(x, conv_w_oihw, conv_b, fc_w_oi, fc_b):
    """Pure-XLA reference (forced full-f32 precision) for verification."""
    conv = jax.lax.conv_general_dilated(
        x, conv_w_oihw, window_strides=(1, 1), padding=((1, 1), (1, 1)),
        dimension_numbers=('NCHW', 'OIHW', 'NCHW'),
        precision=jax.lax.Precision.HIGHEST)
    conv = conv + conv_b[None, :, None, None]
    relu = jnp.maximum(conv, 0.0)
    n, c, h, w = relu.shape
    pool = relu.reshape(n, c, h // 2, 2, w // 2, 2).mean(axis=(3, 5))
    fc = jnp.dot(pool.reshape(n, -1), fc_w_oi.T,
                 precision=jax.lax.Precision.HIGHEST) + fc_b
    return conv, relu, pool, fc


if __name__ == "__main__":
    key = jax.random.PRNGKey(0)
    k_x, k_cw, k_cb, k_fw, k_fb = jax.random.split(key, 5)

    N = 16   # -> 2 grid steps of B=8 images each (both v7x TensorCores busy)
    x = jax.random.normal(k_x, (N, CIN, H, W), jnp.float32)               # NCHW
    conv_w = 0.1 * jax.random.normal(k_cw, (COUT, CIN, 3, 3), jnp.float32)
    conv_b = 0.1 * jax.random.normal(k_cb, (COUT,), jnp.float32)
    fc_w = 0.05 * jax.random.normal(k_fw, (FC_OUT, FC_IN), jnp.float32)
    fc_b = 0.05 * jax.random.normal(k_fb, (FC_OUT,), jnp.float32)

    params = build_params(conv_w, conv_b, fc_w, fc_b)

    extractor = FeatureExtractor(params, ['conv1', 'relu1', 'pool1', 'fc1'])
    outputs = jax.block_until_ready(extractor(x))

    assert outputs['conv1'].shape == (N, COUT, H, W)
    assert outputs['relu1'].shape == (N, COUT, H, W)
    assert outputs['pool1'].shape == (N, COUT, H // 2, W // 2)
    assert 'fc1' not in outputs                       # 'fc' layers not collected
    assert bool(jnp.all(outputs['relu1'] >= 0.0))

    # extracted_layers=None collects every layer (including fc1); verify all
    # activations against the full-f32 XLA reference at ~1e-5 (was 1e-2).
    ref = reference_forward(x, conv_w, conv_b, fc_w, fc_b)
    all_out = jax.block_until_ready(FeatureExtractor(params, None)(x))
    for got, want in zip((all_out['conv1'], all_out['relu1'],
                          all_out['pool1'], all_out['fc1']), ref):
        assert got.shape == want.shape
        assert bool(jnp.allclose(got, want, rtol=1e-5, atol=2e-5)), (
            float(jnp.max(jnp.abs(got - want))))

    # Odd batch exercises the batch-padding path (n=3 -> B=2, 2 steps, 1 pad).
    ref3 = reference_forward(x[:3], conv_w, conv_b, fc_w, fc_b)
    small_out = jax.block_until_ready(FeatureExtractor(params, None)(x[:3]))
    for got, want in zip((small_out['conv1'], small_out['relu1'],
                          small_out['pool1'], small_out['fc1']), ref3):
        assert got.shape == want.shape
        assert bool(jnp.allclose(got, want, rtol=1e-5, atol=2e-5)), (
            float(jnp.max(jnp.abs(got - want))))

    print("KERNEL_OK")
</pallas_src>

<mosaic_0001>
module attributes {stable_mosaic.version = 11 : i64} {
  func.func @_roll_probe_kernel(%arg0: memref<8x128xf32, #tpu.memory_space<vmem>>, %arg1: memref<8x128xf32, #tpu.memory_space<vmem>>) attributes {dimension_semantics = [], scalar_prefetch = 0 : i64, scratch_operands = 0 : i64, tpu.core_type = #tpu.core_type<tc>} {
    %c0 = arith.constant 0 : index
    %c0_0 = arith.constant 0 : index
    %0 = vector.load %arg0[%c0, %c0_0] : memref<8x128xf32, #tpu.memory_space<vmem>>, vector<8x128xf32>
    %c1_i32 = arith.constant 1 : i32
    %1 = tpu.dynamic_rotate %0 by %c1_i32 dim 1 : vector<8x128xf32>, i32 -> vector<8x128xf32>
    %c0_1 = arith.constant 0 : index
    %c0_2 = arith.constant 0 : index
    %2 = vector.load %arg1[%c0_1, %c0_2] : memref<8x128xf32, #tpu.memory_space<vmem>>, vector<8x128xf32>
    tpu.vector_store %arg1[%c0_1, %c0_2], %1 {strides = array<i32>} : memref<8x128xf32, #tpu.memory_space<vmem>>, vector<8x128xf32>,
    return
  }
}

</mosaic_0001>

<llo_original>
// kernel: tpu_custom_call.1
$region0: #{tpu_custom_call.1}
  #allocation0 [shape = 'u32[]', space=smem, size = 0x4, offset = 0x4, fixed_abs, tag = 'smem constant byte address 0x4 - core index']
  #allocation1 [shape = 'u32[72,128]{1,0:T(1,128)}', space=vmem, size = 0x9000, scoped, tag = 'internal scratch']
  %s0 = inlined_call_operand.hbm [shape: f32[8,128], index: 0, kind: input, shape index: {}]
  %s1 = inlined_call_operand.hbm [shape: f32[8,128], index: 1, kind: output, shape index: {}]
  %s2 = sld [smem:[#allocation0]]
  $region18: #{tpu_custom_call.1} parent=0
    _
  %s4 = ssub.s32 1, %s2
  %s5 = scalar_select 0, %s4, %s2
  $region1: #{tpu_custom_call.1} parent=0
    #allocation2 [shape = 'u8[4096]{0}', space=vmem, size = 0x1000, scoped, tag = 'input window, operand 0, single buffered']
    #allocation3 [shape = 's32[1]{0}', space=sflag, size = 0x4, scoped, tag = 'scoped memory for tpu_custom_call.1']
    #allocation4 [shape = 's32[1]{0}', space=sflag, size = 0x4, scoped, tag = 'scoped memory for tpu_custom_call.1']
    #allocation5 [shape = 'u8[4096]{0}', space=vmem, size = 0x1000, scoped, tag = 'output window, operand 0, single buffered']
    %6 = vsyncpa [#allocation3], 0
    %7 = vsyncpa [#allocation4], 0
    // Predicated region
    $region2: #{tpu_custom_call.1} parent=1 // pred_check
      _
    $region3: #{tpu_custom_call.1} parent=1 // pred_check_branch
      %9 = sbr.rel (0) target = $region5
    $region4: #{tpu_custom_call.1} parent=1 // pred_region
      %11 = vsyncadd [#allocation3], 0
      %s13 = sshll.u32 %s0, 4
      %s14 = int_to_ptr.hbm [resolvable:$true] %s13
      %s15 = sshll.u32 [#allocation2], 4
      %s16 = int_to_ptr.vmem [resolvable:$true] %s15
      %18 = dma.hbm_to_vmem [thread:$0]  %s14, 128, %s16, [#allocation3]
    $region5: #{tpu_custom_call.1} parent=1 // pred_fallthru
      _
    // Predicated region
    $region6: #{tpu_custom_call.1} parent=1 // pred_check
      _
    $region7: #{tpu_custom_call.1} parent=1 // pred_check_branch
      %20 = sbr.rel (0) target = $region9
    $region8: #{tpu_custom_call.1} parent=1 // pred_region
      %22 = dma.done [#allocation3], 128
    $region9: #{tpu_custom_call.1} parent=1 // pred_fallthru
      _
    %v23 = vld [vmem:[#allocation2] sm:$0xff]
    %24 = vrot.lane.b32.xlu0 %v23, 1
    %v25 = vpop.permute.xlu0 %24
    %26 = vst [vmem:[#allocation5] sm:$0xff] %v25
    // Predicated region
    $region10: #{tpu_custom_call.1} parent=1 // pred_check
      _
    $region11: #{tpu_custom_call.1} parent=1 // pred_check_branch
      %28 = sbr.rel (0) target = $region13
    $region12: #{tpu_custom_call.1} parent=1 // pred_region
      %30 = vsyncadd [#allocation4], 0
      %s32 = sshll.u32 [#allocation5], 4
      %s33 = int_to_ptr.vmem [resolvable:$true] %s32
      %s34 = sshll.u32 %s1, 4
      %s35 = int_to_ptr.hbm [resolvable:$true] %s34
      %37 = dma.vmem_to_hbm [thread:$0]  %s33, 128, %s35, [#allocation4]
    $region13: #{tpu_custom_call.1} parent=1 // pred_fallthru
      _
    // Predicated region
    $region14: #{tpu_custom_call.1} parent=1 // pred_check
      _
    $region15: #{tpu_custom_call.1} parent=1 // pred_check_branch
      %39 = sbr.rel (0) target = $region17
    $region16: #{tpu_custom_call.1} parent=1 // pred_region
      %41 = dma.done [#allocation4], 128
    $region17: #{tpu_custom_call.1} parent=1 // pred_fallthru
      _
    %42 = vsyncpa [#allocation3], 1
    %43 = vsyncpa [#allocation4], 1

</llo_original>
